<compile_context>
chip_gen: v7x
topology: tpu7x:2x2x1
jax: 0.10.0
libtpu: 0.0.40
codegen_flags: <defaults>
</compile_context>

<pallas_src>
import math

import jax
import jax.numpy as jnp
from jax import lax
from jax.experimental import pallas as pl
from jax.experimental.pallas import tpu as pltpu

NUM_GROUPS = 32   # normalization(channels) == GroupNorm32(32, channels)
GN_EPS = 1e-5
_MIB = 1024 * 1024


def _vmem_limit(resident_bytes):
    # Explicit VMEM budget: measured residency (double-buffered pipeline blocks
    # + in-kernel f32 temporaries) + headroom, floored at the 32 MiB scoped
    # default and clamped at physical VMEM (64 MiB v7x / 128 MiB v5e,v6e).
    try:
        cap = int(pltpu.get_tpu_info().vmem_capacity_bytes)
    except Exception:
        cap = 64 * _MIB          # conservative fallback (v7x size)
    want = max(int(resident_bytes) + 8 * _MIB, 32 * _MIB)
    return int(min(want, cap))


def _pick_tile(total, cap):
    """Largest lane-dense (multiple-of-128) tile <= cap that divides `total`."""
    for t in (512, 384, 256, 128):
        if t <= cap and total % t == 0:
            return t
    # TODO(synk): T not a multiple of 128 falls back to one full-T block (fine
    # for small spatial grids like 8x8=64; a cdiv grid + key masking would be
    # needed to tile large ragged T without a (T,T) logits slab).
    return total


# -------- kernel 1: folded GroupNorm (scale/shift) + 1x1 qkv conv -------------
def _gn_qkv_kernel(x_ref, scale_ref, shift_ref, wqkv_ref, bqkv_ref, qkv_ref):
    # x_ref:        (1, C, tt)  f32   spatial tile of one batch element
    # scale/shift:  (1, C, 1)   f32   per-(batch, channel) GroupNorm scale/shift
    # wqkv:         (3C, C)     bf16  1x1 conv weight (q rows pre-scaled)
    # bqkv:         (3C, 1)     f32   (q rows pre-scaled)
    # qkv_ref:      (1, 3C, tt) bf16
    xn = x_ref[0] * scale_ref[0] + shift_ref[0]               # (C, tt) f32
    qkv = jnp.dot(wqkv_ref[...], xn.astype(jnp.bfloat16),
                  preferred_element_type=jnp.float32) + bqkv_ref[...]
    qkv_ref[0] = qkv.astype(qkv_ref.dtype)


# -------------- kernel 2: attention for one (batch, head, q-tile) -------------
def _attention_kernel(q_ref, k_ref, v_ref, a_ref):
    # q_ref: (1, ch, tq) bf16 (softmax scale already folded into the qkv conv)
    # k_ref / v_ref: (1, ch, T) bf16;  a_ref: (1, ch, tq) bf16
    # logits[t, s] = sum_c q[c, t] k[c, s].  Contracting dim 0 of both operands
    # leaves only the small (ch, tq) q operand in transposed position; the
    # large (ch, T) K tile feeds the MXU as-is.
    logits = lax.dot_general(q_ref[0], k_ref[0], (((0,), (0,)), ((), ())),
                             preferred_element_type=jnp.float32)     # (tq, T)
    # softmax over keys in f32 (matches reference)
    logits = logits - jnp.max(logits, axis=-1, keepdims=True)
    p = jnp.exp(logits)
    p = p * pl.reciprocal(jnp.sum(p, axis=-1, keepdims=True), approx=True)
    # a[c, t] = sum_s v[c, s] p[t, s]  -- transposed-RHS MXU form; neither the
    # (ch, T) V tile nor the (tq, T) P tile is re-laid-out.
    a = lax.dot_general(v_ref[0], p.astype(jnp.bfloat16),
                        (((1,), (1,)), ((), ())),
                        preferred_element_type=jnp.float32)          # (ch, tq)
    a_ref[0] = a.astype(a_ref.dtype)


# ------------------- kernel 3: 1x1 proj conv + residual add -------------------
def _proj_residual_kernel(x_ref, a_ref, wproj_ref, bproj_ref, out_ref):
    # x_ref/out_ref: (1, C, tn) f32;  a_ref: (1, C, tn) bf16
    # wproj: (C, C) bf16;  bproj: (C, 1) f32
    h = jnp.dot(wproj_ref[...], a_ref[0],
                preferred_element_type=jnp.float32) + bproj_ref[...]
    out_ref[0] = (x_ref[0] + h).astype(out_ref.dtype)


def attention_block_forward(x, params, *, num_heads, q_tile=256, t_tile=512):
    """x: [B, C, H, W] float32 (NCHW, same as the PyTorch module)."""
    B, C, H, W = x.shape
    T = H * W
    assert C % NUM_GROUPS == 0 and C % num_heads == 0
    head_ch = C // num_heads
    assert head_ch % 8 == 0, "per-head channel tile must be sublane aligned"
    f32 = jnp.float32
    x3 = x.reshape(B, C, T).astype(f32)

    tq = _pick_tile(T, q_tile)   # query-row tile (256 fills v6e/v7x 256-wide MXU)
    tt = _pick_tile(T, t_tile)   # spatial tile for the two 1x1 convs

    # ---- GroupNorm statistics: tiny per-batch reduction done in plain XLA so
    # the Pallas kernels never keep a full (C, T) slab resident; folded into a
    # per-(batch, channel) scale/shift so kernel 1 is just x*scale + shift. ----
    gc = C // NUM_GROUPS
    xg = x3.reshape(B, NUM_GROUPS, gc * T)
    g_mean = jnp.mean(xg, axis=-1)                                    # (B, G)
    g_var = jnp.mean(jnp.square(xg - g_mean[..., None]), axis=-1)     # biased, two-pass
    g_rstd = lax.rsqrt(g_var + GN_EPS)
    mean_c = jnp.repeat(g_mean, gc, axis=1)                           # (B, C)
    rstd_c = jnp.repeat(g_rstd, gc, axis=1)                           # (B, C)
    gamma = params["gn_weight"].astype(f32)
    beta = params["gn_bias"].astype(f32)
    gn_scale = (gamma[None, :] * rstd_c).reshape(B, C, 1)
    gn_shift = (beta[None, :] - mean_c * gamma[None, :] * rstd_c).reshape(B, C, 1)

    # ---- weights: bf16 MXU operands; fold the softmax scale 1/sqrt(head_ch)
    # once into the q rows of the qkv conv (QKVAttentionLegacy head layout). ---
    row = jnp.arange(3 * C) % (3 * head_ch)
    qscale = jnp.where(row < head_ch, 1.0 / math.sqrt(head_ch), 1.0).astype(f32)
    wqkv = (params["w_qkv"].astype(f32) * qscale[:, None]).astype(jnp.bfloat16)
    bqkv = (params["b_qkv"].astype(f32) * qscale).reshape(3 * C, 1)
    wproj = params["w_proj"].astype(jnp.bfloat16)                     # (C, C)
    bproj = params["b_proj"].reshape(C, 1).astype(f32)

    const2d = lambda shape: pl.BlockSpec(shape, lambda *_: (0, 0))

    # ---- call 1: GroupNorm affine + qkv 1x1 conv -> qkv [B, 3C, T] (bf16) ----
    n_tt = T // tt
    resident_a = (2 * (C * tt * 4 + 3 * C * tt * 2)                # x/out, dbl-buffered
                  + 2 * (3 * C * C * 2 + 3 * C * 4 + 2 * C * 4)    # weights/bias/scale
                  + C * tt * 6 + 3 * C * tt * 4)                   # xn f32+bf16, f32 acc
    qkv = pl.pallas_call(
        _gn_qkv_kernel,
        out_shape=jax.ShapeDtypeStruct((B, 3 * C, T), jnp.bfloat16),
        grid=(B, n_tt),
        in_specs=[
            pl.BlockSpec((1, C, tt), lambda b, t: (b, 0, t)),
            pl.BlockSpec((1, C, 1), lambda b, t: (b, 0, 0)),
            pl.BlockSpec((1, C, 1), lambda b, t: (b, 0, 0)),
            const2d((3 * C, C)), const2d((3 * C, 1)),
        ],
        out_specs=pl.BlockSpec((1, 3 * C, tt), lambda b, t: (b, 0, t)),
        compiler_params=pltpu.CompilerParams(
            dimension_semantics=("parallel", "parallel"),
            vmem_limit_bytes=_vmem_limit(resident_a)),
        cost_estimate=pl.CostEstimate(
            flops=2 * B * (3 * C) * C * T,
            transcendentals=0,
            bytes_accessed=B * C * T * 4 + B * 3 * C * T * 2 + 3 * C * C * 2),
    )(x3, gn_scale, gn_shift, wqkv, bqkv)

    # ---- call 2: attention over a parallel (batch, head, q-tile) grid --------
    n_qt = T // tq
    resident_b = (2 * (2 * head_ch * tq * 2 + 2 * head_ch * T * 2)  # q/out + K/V blocks
                  + 2 * tq * T * 4 + tq * T * 2                     # logits/p f32, p bf16
                  + head_ch * tq * 4)                               # a f32
    a = pl.pallas_call(
        _attention_kernel,
        out_shape=jax.ShapeDtypeStruct((B, C, T), jnp.bfloat16),
        grid=(B, num_heads, n_qt),
        in_specs=[
            # QKVAttentionLegacy layout: head h owns rows [3h*ch, 3(h+1)*ch)
            pl.BlockSpec((1, head_ch, tq), lambda b, h, qt: (b, 3 * h, qt)),
            pl.BlockSpec((1, head_ch, T), lambda b, h, qt: (b, 3 * h + 1, 0)),
            pl.BlockSpec((1, head_ch, T), lambda b, h, qt: (b, 3 * h + 2, 0)),
        ],
        out_specs=pl.BlockSpec((1, head_ch, tq), lambda b, h, qt: (b, h, qt)),
        compiler_params=pltpu.CompilerParams(
            dimension_semantics=("parallel", "parallel", "parallel"),
            vmem_limit_bytes=_vmem_limit(resident_b)),
        cost_estimate=pl.CostEstimate(
            flops=4 * B * C * T * T,
            transcendentals=B * num_heads * T * T,
            bytes_accessed=B * 3 * C * T * 2 + B * C * T * 2),
    )(qkv, qkv, qkv)

    # ---- call 3: proj 1x1 conv + residual, tiled over T ----------------------
    tn = tt
    n_tn = T // tn
    resident_c = (2 * (2 * C * tn * 4 + C * tn * 2)                 # x/out/a, dbl-buffered
                  + 2 * (C * C * 2 + C * 4)                         # wproj/bproj
                  + C * tn * 4)                                     # h f32
    out = pl.pallas_call(
        _proj_residual_kernel,
        out_shape=jax.ShapeDtypeStruct((B, C, T), x.dtype),
        grid=(B, n_tn),
        in_specs=[
            pl.BlockSpec((1, C, tn), lambda b, t: (b, 0, t)),
            pl.BlockSpec((1, C, tn), lambda b, t: (b, 0, t)),
            const2d((C, C)), const2d((C, 1)),
        ],
        out_specs=pl.BlockSpec((1, C, tn), lambda b, t: (b, 0, t)),
        compiler_params=pltpu.CompilerParams(
            dimension_semantics=("parallel", "parallel"),
            vmem_limit_bytes=_vmem_limit(resident_c)),
        cost_estimate=pl.CostEstimate(
            flops=2 * B * C * C * T,
            transcendentals=0,
            bytes_accessed=2 * B * C * T * 4 + B * C * T * 2 + C * C * 2),
    )(x3, a, wproj, bproj)

    return out.reshape(B, C, H, W)


# ---------------- pure-JAX reference (mirrors the PyTorch module) -------------
def reference_forward(x, params, *, num_heads):
    B, C, H, W = x.shape
    T = H * W
    xr = x.reshape(B, C, T).astype(jnp.float32)
    # GroupNorm(32, C), eps=1e-5, biased variance, f32 compute
    xg = xr.reshape(B, NUM_GROUPS, (C // NUM_GROUPS) * T)
    mean = xg.mean(-1, keepdims=True)
    var = ((xg - mean) ** 2).mean(-1, keepdims=True)
    xn = ((xg - mean) / jnp.sqrt(var + GN_EPS)).reshape(B, C, T)
    xn = xn * params["gn_weight"][None, :, None] + params["gn_bias"][None, :, None]
    qkv = jnp.einsum("oc,bct->bot", params["w_qkv"], xn) \
        + params["b_qkv"][None, :, None]
    ch = C // num_heads
    qkv = qkv.reshape(B * num_heads, 3 * ch, T)
    q, k, v = qkv[:, :ch], qkv[:, ch:2 * ch], qkv[:, 2 * ch:]
    scale = 1.0 / math.sqrt(math.sqrt(ch))
    w = jnp.einsum("bct,bcs->bts", q * scale, k * scale)
    w = jax.nn.softmax(w, axis=-1)
    a = jnp.einsum("bts,bcs->bct", w, v).reshape(B, C, T)
    h = jnp.einsum("oc,bct->bot", params["w_proj"], a) \
        + params["b_proj"][None, :, None]
    return (xr + h).reshape(B, C, H, W)


if __name__ == "__main__":
    B, C, Hs, Ws = 2, 64, 16, 16         # T = 256 (lane-dense), C % 32 == 0
    num_heads = 2                        # head_channels = 32

    key = jax.random.PRNGKey(0)
    keys = jax.random.split(key, 8)
    x = jax.random.normal(keys[0], (B, C, Hs, Ws), dtype=jnp.float32)

    # NOTE: the original module zero-initializes proj_out (zero_module); small
    # deterministic random weights are used here so the attention path is
    # actually exercised.
    params = {
        "gn_weight": 1.0 + 0.1 * jax.random.normal(keys[1], (C,), jnp.float32),
        "gn_bias": 0.1 * jax.random.normal(keys[2], (C,), jnp.float32),
        "w_qkv": 0.05 * jax.random.normal(keys[3], (3 * C, C), jnp.float32),
        "b_qkv": 0.05 * jax.random.normal(keys[4], (3 * C,), jnp.float32),
        "w_proj": 0.05 * jax.random.normal(keys[5], (C, C), jnp.float32),
        "b_proj": 0.05 * jax.random.normal(keys[6], (C,), jnp.float32),
    }

    out = attention_block_forward(x, params, num_heads=num_heads)
    out = jax.block_until_ready(out)

    ref = reference_forward(x, params, num_heads=num_heads)
    assert out.shape == (B, C, Hs, Ws)
    # bf16 MXU operands / bf16 intermediates + approx-reciprocal softmax =>
    # looser tolerance than the all-f32 reference.
    err = float(jnp.max(jnp.abs(out - ref)))
    assert jnp.allclose(out, ref, atol=3e-2, rtol=3e-2), f"max abs err {err}"
    print("KERNEL_OK")
</pallas_src>

<mosaic_0001>
module attributes {stable_mosaic.version = 11 : i64} {
  func.func @_gn_qkv_kernel(%arg0: i32, %arg1: i32, %arg2: memref<1x64x256xf32, #tpu.memory_space<vmem>>, %arg3: memref<1x64x1xf32, #tpu.memory_space<vmem>>, %arg4: memref<1x64x1xf32, #tpu.memory_space<vmem>>, %arg5: memref<192x64xbf16, #tpu.memory_space<vmem>>, %arg6: memref<192x1xf32, #tpu.memory_space<vmem>>, %arg7: memref<1x192x256xbf16, #tpu.memory_space<vmem>>) attributes {dimension_semantics = [#tpu.dimension_semantics<parallel>, #tpu.dimension_semantics<parallel>], iteration_bounds = array<i64: 2, 1>, scalar_prefetch = 0 : i64, scratch_operands = 0 : i64, tpu.core_type = #tpu.core_type<tc>, window_params = [{transform_indices = @transform_0, window_bounds = array<i64: 1, 64, 256>}, {transform_indices = @transform_1, window_bounds = array<i64: 1, 64, 1>}, {transform_indices = @transform_2, window_bounds = array<i64: 1, 64, 1>}, {pipeline_mode = #tpu.pipeline_mode<synchronous>, transform_indices = @transform_3, window_bounds = array<i64: 192, 64>}, {pipeline_mode = #tpu.pipeline_mode<synchronous>, transform_indices = @transform_4, window_bounds = array<i64: 192, 1>}, {transform_indices = @transform_5, window_bounds = array<i64: 1, 192, 256>}]} {
    %c0 = arith.constant 0 : index
    %c0_0 = arith.constant 0 : index
    %c0_1 = arith.constant 0 : index
    %0 = vector.load %arg2[%c0, %c0_0, %c0_1] : memref<1x64x256xf32, #tpu.memory_space<vmem>>, vector<1x64x256xf32>
    %1 = vector.shape_cast %0 : vector<1x64x256xf32> to vector<64x256xf32>
    %c0_2 = arith.constant 0 : index
    %c0_3 = arith.constant 0 : index
    %c0_4 = arith.constant 0 : index
    %2 = vector.load %arg3[%c0_2, %c0_3, %c0_4] : memref<1x64x1xf32, #tpu.memory_space<vmem>>, vector<1x64x1xf32>
    %3 = vector.shape_cast %2 : vector<1x64x1xf32> to vector<64x1xf32>
    %4 = vector.broadcast %3 : vector<64x1xf32> to vector<64x256xf32>
    %5 = arith.mulf %1, %4 : vector<64x256xf32>
    %c0_5 = arith.constant 0 : index
    %c0_6 = arith.constant 0 : index
    %c0_7 = arith.constant 0 : index
    %6 = vector.load %arg4[%c0_5, %c0_6, %c0_7] : memref<1x64x1xf32, #tpu.memory_space<vmem>>, vector<1x64x1xf32>
    %7 = vector.shape_cast %6 : vector<1x64x1xf32> to vector<64x1xf32>
    %8 = vector.broadcast %7 : vector<64x1xf32> to vector<64x256xf32>
    %9 = arith.addf %5, %8 : vector<64x256xf32>
    %c0_8 = arith.constant 0 : index
    %c0_9 = arith.constant 0 : index
    %10 = vector.load %arg5[%c0_8, %c0_9] : memref<192x64xbf16, #tpu.memory_space<vmem>>, vector<192x64xbf16>
    %11 = arith.truncf %9 : vector<64x256xf32> to vector<64x256xbf16>
    %cst = arith.constant dense<0.000000e+00> : vector<192x256xf32>
    %12 = tpu.matmul %10, %11, %cst {dimension_numbers = #tpu.dot_dimension_numbers<[1], [0], [0], [1], [0, 0, 1, 1], [], []>} : vector<192x64xbf16>, vector<64x256xbf16>, vector<192x256xf32> -> vector<192x256xf32>
    %c0_10 = arith.constant 0 : index
    %c0_11 = arith.constant 0 : index
    %13 = vector.load %arg6[%c0_10, %c0_11] : memref<192x1xf32, #tpu.memory_space<vmem>>, vector<192x1xf32>
    %14 = vector.broadcast %13 : vector<192x1xf32> to vector<192x256xf32>
    %15 = arith.addf %12, %14 : vector<192x256xf32>
    %16 = arith.truncf %15 : vector<192x256xf32> to vector<192x256xbf16>
    %c0_12 = arith.constant 0 : index
    %c0_13 = arith.constant 0 : index
    %c0_14 = arith.constant 0 : index
    %17 = vector.load %arg7[%c0_12, %c0_13, %c0_14] : memref<1x192x256xbf16, #tpu.memory_space<vmem>>, vector<1x192x256xbf16>
    %18 = vector.shape_cast %17 : vector<1x192x256xbf16> to vector<192x256xbf16>
    %19 = vector.shape_cast %16 : vector<192x256xbf16> to vector<1x192x256xbf16>
    tpu.vector_store %arg7[%c0_12, %c0_13, %c0_14], %19 {strides = array<i32>} : memref<1x192x256xbf16, #tpu.memory_space<vmem>>, vector<1x192x256xbf16>,
    return
  }
  func.func @transform_0(%arg0: i32, %arg1: i32) -> (i32, i32, i32) {
    %c0_i32 = arith.constant 0 : i32
    %c0_i32_0 = arith.constant 0 : i32
    return %arg0, %c0_i32, %arg1 : i32, i32, i32
  }
  func.func @transform_1(%arg0: i32, %arg1: i32) -> (i32, i32, i32) {
    %c0_i32 = arith.constant 0 : i32
    %c0_i32_0 = arith.constant 0 : i32
    %c0_i32_1 = arith.constant 0 : i32
    return %arg0, %c0_i32, %c0_i32_0 : i32, i32, i32
  }
  func.func @transform_2(%arg0: i32, %arg1: i32) -> (i32, i32, i32) {
    %c0_i32 = arith.constant 0 : i32
    %c0_i32_0 = arith.constant 0 : i32
    %c0_i32_1 = arith.constant 0 : i32
    return %arg0, %c0_i32, %c0_i32_0 : i32, i32, i32
  }
  func.func @transform_3(%arg0: i32, %arg1: i32) -> (i32, i32) {
    %c0_i32 = arith.constant 0 : i32
    %c0_i32_0 = arith.constant 0 : i32
    %c0_i32_1 = arith.constant 0 : i32
    return %c0_i32, %c0_i32_0 : i32, i32
  }
  func.func @transform_4(%arg0: i32, %arg1: i32) -> (i32, i32) {
    %c0_i32 = arith.constant 0 : i32
    %c0_i32_0 = arith.constant 0 : i32
    %c0_i32_1 = arith.constant 0 : i32
    return %c0_i32, %c0_i32_0 : i32, i32
  }
  func.func @transform_5(%arg0: i32, %arg1: i32) -> (i32, i32, i32) {
    %c0_i32 = arith.constant 0 : i32
    %c0_i32_0 = arith.constant 0 : i32
    return %arg0, %c0_i32, %arg1 : i32, i32, i32
  }
}

</mosaic_0001>

<llo_original>
// kernel: tpu_custom_call.1
$region0: #{tpu_custom_call.1}
  #allocation0 [shape = 'u32[]', space=smem, size = 0x4, offset = 0x4, fixed_abs, tag = 'smem constant byte address 0x4 - core index']
  #allocation1 [shape = 'u32[144,128]{1,0:T(1,128)}', space=vmem, size = 0x12000, scoped, tag = 'internal scratch']
  %s0 = inlined_call_operand.vmem [shape: f32[2,64,256], index: 0, kind: input, shape index: {}]
  %s1 = inlined_call_operand.vmem [shape: f32[2,64,1], index: 1, kind: input, shape index: {}]
  %s2 = inlined_call_operand.vmem [shape: f32[2,64,1], index: 2, kind: input, shape index: {}]
  %s3 = inlined_call_operand.vmem [shape: bf16[192,64], index: 3, kind: input, shape index: {}]
  %s4 = inlined_call_operand.vmem [shape: f32[192,1], index: 4, kind: input, shape index: {}]
  %s5 = inlined_call_operand.hbm [shape: bf16[2,192,256], index: 5, kind: output, shape index: {}]
  %s6 = sld [smem:[#allocation0]]
  $region53: #{tpu_custom_call.1} parent=0
    _
  %s8 = ssub.s32 1, %s6
  %s9 = scalar_select 0, %s8, %s6
  $region1: #{tpu_custom_call.1} parent=0
    #allocation2 [shape = 'u8[196608]{0}', space=vmem, size = 0x30000, scoped, tag = 'output window, operand 0']
    #allocation3 [shape = 's32[2]{0}', space=sflag, size = 0x8, scoped, tag = 'scoped memory for tpu_custom_call.1']
    %10 = vsyncpa [#allocation3], 0
    %s11 = scalar_lea.sflag [#allocation3], 1
    %12 = vsyncpa %s11, 0
    loop: start=0, step=1, limit=4
    $region2: #{tpu_custom_call.1} parent=1 // loop_pre_header
      _
    $region3: #{tpu_custom_call.1} parent=1 // loop_header
      %s14 = sphi 0, %s18
      %p15 = scmp.ge.s32.totalorder %s14, 4
      %s21 = sphi 0, %s33
      %s22 = sphi 0, %s29
      %s23 = sphi 0, %s21
      %s24 = sphi 0, %s22
      %s25 = sphi 0, %s23
      %s26 = sphi 0, %s24
      %s38 = sphi 0, %s40
      %s41 = sphi 0, %s38
      %s42 = sphi 0, %s41
      %s58 = sphi 0, %s42
      %s64 = sphi 0, %s66
      %s67 = sphi 0, %s64
      %s68 = sphi 0, %s67
      %s84 = sphi 0, %s68
      %s90 = sphi 0, %s92
      %s93 = sphi 0, %s90
      %s94 = sphi 0, %s93
      %s110 = sphi 0, %s94
      %s114 = sphi 0, %s114
      %s116 = sphi 0, %s114
      %s117 = sphi 0, %s116
      %s131 = sphi 0, %s117
      %s135 = sphi 0, %s135
      %s137 = sphi 0, %s135
      %s138 = sphi 0, %s137
      %s152 = sphi 0, %s138
      %s160 = sphi 0, %s162
      %s163 = sphi 0, %s160
      %s164 = sphi 0, %s163
      %s180 = sphi 0, %s164
    $region4: #{tpu_custom_call.1} parent=1 // loop_header_branch
      %17 = sbr.rel (%p15) target = $region8
    $region5: #{tpu_custom_call.1} parent=1 // loop_body
      %s19 = ssub.s32 %s14, 1
      %s20 = ssub.s32 %s14, 2
      %s27 = sadd.s32 1, %s22
      %p28 = scmp.ge.s32.totalorder %s27, 1
      %s29 = scalar_select %p28, 0, %s27
      %s30 = sadd.s32 1, %s21
      %s31 = scalar_select %p28, %s30, %s21
      %p32 = scmp.ge.s32.totalorder %s31, 2
      %s33 = scalar_select %p32, 0, %s31
      %s34 = ssub.s32 %s21, %s33
      %s35 = ssub.s32 %s22, %s29
      %s36 = sor.u32 %s34, %s35
      %p37 = scmp.eq.s32.totalorder %s36, 0
      %s39 = sadd.s32 %s38, 1
      %s40 = scalar_select %p37, %s38, %s39
      %p43 = pneg %p37
      %p44 = scmp.eq.s32.totalorder %s14, 1
      %p45 = por %p43, %p44
      %p46 = scmp.ne.s32.totalorder %s38, %s41
      %p47 = scmp.eq.s32.totalorder %s14, 0
      %p48 = por %p46, %p47
      %p49 = scmp.ne.s32.totalorder %s38, %s41
      %p50 = scmp.eq.s32.totalorder %s19, 1
      %p51 = por %p49, %p50
      %p52 = scmp.ne.s32.totalorder %s41, %s42
      %p53 = scmp.eq.s32.totalorder %s19, 0
      %p54 = por %p52, %p53
      %p55 = scmp.ne.s32.totalorder %s41, %s42
      %p56 = scmp.eq.s32.totalorder %s20, 1
      %p57 = por %p55, %p56
      %p59 = scmp.ne.s32.totalorder %s42, %s58
      %p60 = scmp.eq.s32.totalorder %s20, 0
      %p61 = por %p59, %p60
      %s62 = ssub.s32 %s21, %s33
      %p63 = scmp.eq.s32.totalorder %s62, 0
      %s65 = sadd.s32 %s64, 1
      %s66 = scalar_select %p63, %s64, %s65
      %p69 = pneg %p63
      %p70 = scmp.eq.s32.totalorder %s14, 1
      %p71 = por %p69, %p70
      %p72 = scmp.ne.s32.totalorder %s64, %s67
      %p73 = scmp.eq.s32.totalorder %s14, 0
      %p74 = por %p72, %p73
      %p75 = scmp.ne.s32.totalorder %s64, %s67
      %p76 = scmp.eq.s32.totalorder %s19, 1
      %p77 = por %p75, %p76
      %p78 = scmp.ne.s32.totalorder %s67, %s68
      %p79 = scmp.eq.s32.totalorder %s19, 0
      %p80 = por %p78, %p79
      %p81 = scmp.ne.s32.totalorder %s67, %s68
      %p82 = scmp.eq.s32.totalorder %s20, 1
      %p83 = por %p81, %p82
      %p85 = scmp.ne.s32.totalorder %s68, %s84
      %p86 = scmp.eq.s32.totalorder %s20, 0
      %p87 = por %p85, %p86
      %s88 = ssub.s32 %s21, %s33
      %p89 = scmp.eq.s32.totalorder %s88, 0
      %s91 = sadd.s32 %s90, 1
      %s92 = scalar_select %p89, %s90, %s91
      %p95 = pneg %p89
      %p96 = scmp.eq.s32.totalorder %s14, 1
      %p97 = por %p95, %p96
      %p98 = scmp.ne.s32.totalorder %s90, %s93
      %p99 = scmp.eq.s32.totalorder %s14, 0
      %p100 = por %p98, %p99
      %p101 = scmp.ne.s32.totalorder %s90, %s93
      %p102 = scmp.eq.s32.totalorder %s19, 1
      %p103 = por %p101, %p102
      %p104 = scmp.ne.s32.totalorder %s93, %s94
      %p105 = scmp.eq.s32.totalorder %s19, 0
      %p106 = por %p104, %p105
      %p107 = scmp.ne.s32.totalorder %s93, %s94
      %p108 = scmp.eq.s32.totalorder %s20, 1
      %p109 = por %p107, %p108
      %p111 = scmp.ne.s32.totalorder %s94, %s110
      %p112 = scmp.eq.s32.totalorder %s20, 0
      %p113 = por %p111, %p112
      %s115 = sadd.s32 %s114, 1
      %p118 = scmp.eq.s32.totalorder %s14, 1
      %p119 = scmp.ne.s32.totalorder %s114, %s116
      %p120 = scmp.eq.s32.totalorder %s14, 0
      %p121 = por %p119, %p120
      %p122 = scmp.ne.s32.totalorder %s114, %s116
      %p123 = scmp.eq.s32.totalorder %s19, 1
      %p124 = por %p122, %p123
      %p125 = scmp.ne.s32.totalorder %s116, %s117
      %p126 = scmp.eq.s32.totalorder %s19, 0
      %p127 = por %p125, %p126
      %p128 = scmp.ne.s32.totalorder %s116, %s117
      %p129 = scmp.eq.s32.totalorder %s20, 1
      %p130 = por %p128, %p129
      %p132 = scmp.ne.s32.totalorder %s117, %s131
      %p133 = scmp.eq.s32.totalorder %s20, 0
      %p134 = por %p132, %p133
      %s136 = sadd.s32 %s135, 1
      %p139 = scmp.eq.s32.totalorder %s14, 1
      %p140 = scmp.ne.s32.totalorder %s135, %s137
      %p141 = scmp.eq.s32.totalorder %s14, 0
      %p142 = por %p140, %p141
      %p143 = scmp.ne.s32.totalorder %s135, %s137
      %p144 = scmp.eq.s32.totalorder %s19, 1
      %p145 = por %p143, %p144
      %p146 = scmp.ne.s32.totalorder %s137, %s138
      %p147 = scmp.eq.s32.totalorder %s19, 0
      %p148 = por %p146, %p147
      %p149 = scmp.ne.s32.totalorder %s137, %s138
      %p150 = scmp.eq.s32.totalorder %s20, 1
      %p151 = por %p149, %p150
      %p153 = scmp.ne.s32.totalorder %s138, %s152
      %p154 = scmp.eq.s32.totalorder %s20, 0
      %p155 = por %p153, %p154
      %s156 = ssub.s32 %s21, %s33
      %s157 = ssub.s32 %s22, %s29
      %s158 = sor.u32 %s156, %s157
      %p159 = scmp.eq.s32.totalorder %s158, 0
      %s161 = sadd.s32 %s160, 1
      %s162 = scalar_select %p159, %s160, %s161
      %p165 = pneg %p159
      %p166 = scmp.eq.s32.totalorder %s14, 1
      %p167 = por %p165, %p166
      %p168 = scmp.ne.s32.totalorder %s160, %s163
      %p169 = scmp.eq.s32.totalorder %s14, 0
      %p170 = por %p168, %p169
      %p171 = scmp.ne.s32.totalorder %s160, %s163
      %p172 = scmp.eq.s32.totalorder %s19, 1
      %p173 = por %p171, %p172
      %p174 = scmp.ne.s32.totalorder %s163, %s164
      %p175 = scmp.eq.s32.totalorder %s19, 0
      %p176 = por %p174, %p175
      %p177 = scmp.ne.s32.totalorder %s163, %s164
      %p178 = scmp.eq.s32.totalorder %s20, 1
      %p179 = por %p177, %p178
      %p181 = scmp.ne.s32.totalorder %s164, %s180
      %p182 = scmp.eq.s32.totalorder %s20, 0
      %p183 = por %p181, %p182
      %p184 = scmp.le.s32.totalorder 1, %s14
      %p185 = scmp.lt.s32.totalorder %s14, 3
      %p186 = pnand %p184, %p185
      %p187 = pneg %p186
      // Predicated region
      $region9: #{tpu_custom_call.1} parent=5 // pred_check
        _
      $region10: #{tpu_custom_call.1} parent=5 // pred_check_branch
        %189 = sbr.rel (%p186) target = $region12
      $region11: #{tpu_custom_call.1} parent=5 // pred_region
        %s190 = ssub.s32 %s14, 1
        // Predicated region
        $region13: #{tpu_custom_call.1} parent=11 // pred_check
          %p191 = pneg %p127
        $region14: #{tpu_custom_call.1} parent=11 // pred_check_branch
          %193 = sbr.rel (%p191) target = $region16
        $region15: #{tpu_custom_call.1} parent=11 // pred_region
          _
        $region16: #{tpu_custom_call.1} parent=11 // pred_fallthru
          _
        // Predicated region
        $region17: #{tpu_custom_call.1} parent=11 // pred_check
          %p194 = pneg %p148
        $region18: #{tpu_custom_call.1} parent=11 // pred_check_branch
          %196 = sbr.rel (%p194) target = $region20
        $region19: #{tpu_custom_call.1} parent=11 // pred_region
          _
        $region20: #{tpu_custom_call.1} parent=11 // pred_fallthru
          _
      $region12: #{tpu_custom_call.1} parent=5 // pred_fallthru
        _
      %p197 = scmp.lt.s32.totalorder %s14, 2
      // Predicated region
      $region21: #{tpu_custom_call.1} parent=5 // pred_check
        %p198 = pneg %p197
      $region22: #{tpu_custom_call.1} parent=5 // pred_check_branch
        %200 = sbr.rel (%p198) target = $region24
      $region23: #{tpu_custom_call.1} parent=5 // pred_region
        // Predicated region
        $region25: #{tpu_custom_call.1} parent=23 // pred_check
          %p201 = pneg %p48
        $region26: #{tpu_custom_call.1} parent=23 // pred_check_branch
          %203 = sbr.rel (%p201) target = $region28
        $region27: #{tpu_custom_call.1} parent=23 // pred_region
          %s204 = smul.u32 2, %s22
          %p205 = scmp.lt.s32.totalorder %s21, 1
          %s206 = scalar_select %p205, %s21, 1
          %p207 = scmp.lt.s32.totalorder %s204, 1
          %s208 = scalar_select %p207, %s204, 1
          %s209 = smul.addr %s206, 16
          %s210 = sadd.s32 %s208, %s209
          %s211 = smul.addr %s210, 8
          %s212 = scalar_lea.vmem %s0, %s211
          %s213 = smul.u32 2, %s22
        $region28: #{tpu_custom_call.1} parent=23 // pred_fallthru
          _
        // Predicated region
        $region29: #{tpu_custom_call.1} parent=23 // pred_check
          %p214 = pneg %p74
        $region30: #{tpu_custom_call.1} parent=23 // pred_check_branch
          %216 = sbr.rel (%p214) target = $region32
        $region31: #{tpu_custom_call.1} parent=23 // pred_region
          %p217 = scmp.lt.s32.totalorder %s21, 1
          %s218 = scalar_select %p217, %s21, 1
          %s219 = smul.addr %s218, 8
          %s220 = smul.addr %s219, 8
          %s221 = scalar_lea.vmem %s1, %s220
        $region32: #{tpu_custom_call.1} parent=23 // pred_fallthru
          _
        // Predicated region
        $region33: #{tpu_custom_call.1} parent=23 // pred_check
          %p222 = pneg %p100
        $region34: #{tpu_custom_call.1} parent=23 // pred_check_branch
          %224 = sbr.rel (%p222) target = $region36
        $region35: #{tpu_custom_call.1} parent=23 // pred_region
          %p225 = scmp.lt.s32.totalorder %s21, 1
          %s226 = scalar_select %p225, %s21, 1
          %s227 = smul.addr %s226, 8
          %s228 = smul.addr %s227, 8
          %s229 = scalar_lea.vmem %s2, %s228
        $region36: #{tpu_custom_call.1} parent=23 // pred_fallthru
          _
      $region24: #{tpu_custom_call.1} parent=5 // pred_fallthru
        _
      %p230 = scmp.le.s32.totalorder 1, %s14
      %p231 = scmp.lt.s32.totalorder %s14, 3
      %p232 = pnand %p230, %p231
      %p233 = pneg %p232
      // Predicated region
      $region37: #{tpu_custom_call.1} parent=5 // pred_check
        _
      $region38: #{tpu_custom_call.1} parent=5 // pred_check_branch
        %235 = sbr.rel (%p232) target = $region40
      $region39: #{tpu_custom_call.1} parent=5 // pred_region
        %s236 = ssub.s32 %s14, 1
        %s237 = smul.u32 2, %s24
        %p238 = scmp.lt.s32.totalorder %s23, 1
        %s239 = scalar_select %p238, %s23, 1
        %p240 = scmp.lt.s32.totalorder %s237, 1
        %s241 = scalar_select %p240, %s237, 1
        %s242 = smul.addr %s239, 16
        %s243 = sadd.s32 %s241, %s242
        %s244 = smul.addr %s243, 8
        %s245 = scalar_lea.vmem %s0, %s244
        %p246 = pneg %p54
        %p247 = pneg %p51
        %p248 = scmp.lt.s32.totalorder %s23, 1
        %s249 = scalar_select %p248, %s23, 1
        %s250 = smul.addr %s249, 8
        %s251 = smul.addr %s250, 8
        %s252 = scalar_lea.vmem %s1, %s251
        %p253 = pneg %p80
        %p254 = pneg %p77
        %p255 = scmp.lt.s32.totalorder %s23, 1
        %s256 = scalar_select %p255, %s23, 1
        %s257 = smul.addr %s256, 8
        %s258 = smul.addr %s257, 8
        %s259 = scalar_lea.vmem %s2, %s258
        %p260 = pneg %p106
        %p261 = pneg %p103
        %p262 = pneg %p127
        %p263 = pneg %p124
        %p264 = pneg %p148
        %p265 = pneg %p145
        %p266 = pneg %p176
        %p267 = pneg %p173
        %s268 = sand.u32 %s163, 1
        %s269 = scalar_lea.sflag [#allocation3], %s268
        %s270 = sand.u32 %s163, 1
        %s271 = smul.addr %s270, 192
        %s272 = scalar_lea.vmem [#allocation2], %s271
        %s273 = smul.u32 2, %s24
        %p274 = scmp.lt.s32.totalorder %s23, 1
        %s275 = scalar_select %p274, %s23, 1
        %p276 = scmp.lt.s32.totalorder %s273, 1
        %s277 = scalar_select %p276, %s273, 1
        %s278 = smul.addr %s275, 16
        %s279 = sadd.s32 %s277, %s278
        %s280 = smul.addr %s279, 8
        %s281 = scalar_lea.vmem %s0, %s280
        %s282 = smul.u32 2, %s24
        %p283 = scmp.lt.s32.totalorder %s23, 1
        %s284 = scalar_select %p283, %s23, 1
        %s285 = smul.addr %s284, 8
        %s286 = smul.addr %s285, 8
        %s287 = scalar_lea.vmem %s1, %s286
        %p288 = scmp.lt.s32.totalorder %s23, 1
        %s289 = scalar_select %p288, %s23, 1
        %s290 = smul.addr %s289, 8
        %s291 = smul.addr %s290, 8
        %s292 = scalar_lea.vmem %s2, %s291
        %s293 = smul.u32 2, %s24
        %v295 = vld [vmem:[%s281] sm:$0xff]
        %v296 = vld [vmem:[%s281 + $0x8] sm:$0xff]
        %v297 = vld [vmem:[%s281 + $0x10] sm:$0xff]
        %v298 = vld [vmem:[%s281 + $0x18] sm:$0xff]
        %v299 = vld [vmem:[%s281 + $0x20] sm:$0xff]
        %v300 = vld [vmem:[%s281 + $0x28] sm:$0xff]
        %v301 = vld [vmem:[%s281 + $0x30] sm:$0xff]
        %v302 = vld [vmem:[%s281 + $0x38] sm:$0xff]
        %v303 = vld [vmem:[%s281 + $0x40] sm:$0xff]
        %v304 = vld [vmem:[%s281 + $0x48] sm:$0xff]
        %v305 = vld [vmem:[%s281 + $0x50] sm:$0xff]
        %v306 = vld [vmem:[%s281 + $0x58] sm:$0xff]
        %v307 = vld [vmem:[%s281 + $0x60] sm:$0xff]
        %v308 = vld [vmem:[%s281 + $0x68] sm:$0xff]
        %v309 = vld [vmem:[%s281 + $0x70] sm:$0xff]
        %v310 = vld [vmem:[%s281 + $0x78] sm:$0xff]
        %v311 = vld [vmem:[%s287] sm:$0xff]
        %v312 = vld [vmem:[%s287 + $0x8] sm:$0xff]
        %v313 = vld [vmem:[%s287 + $0x10] sm:$0xff]
        %v314 = vld [vmem:[%s287 + $0x18] sm:$0xff]
        %v315 = vld [vmem:[%s287 + $0x20] sm:$0xff]
        %v316 = vld [vmem:[%s287 + $0x28] sm:$0xff]
        %v317 = vld [vmem:[%s287 + $0x30] sm:$0xff]
        %v318 = vld [vmem:[%s287 + $0x38] sm:$0xff]
        %320 = vset.pattern.permute.xlu0 0
        %321 = vperm.xlu0 %320, %v311
        %v322 = vpop.permute.xlu0 %321
        %325 = vset.pattern.permute.xlu0 0
        %326 = vperm.xlu0 %325, %v312
        %v327 = vpop.permute.xlu0 %326
        %330 = vset.pattern.permute.xlu0 0
        %331 = vperm.xlu0 %330, %v313
        %v332 = vpop.permute.xlu0 %331
        %335 = vset.pattern.permute.xlu0 0
        %336 = vperm.xlu0 %335, %v314
        %v337 = vpop.permute.xlu0 %336
        %340 = vset.pattern.permute.xlu0 0
        %341 = vperm.xlu0 %340, %v315
        %v342 = vpop.permute.xlu0 %341
        %345 = vset.pattern.permute.xlu0 0
        %346 = vperm.xlu0 %345, %v316
        %v347 = vpop.permute.xlu0 %346
        %350 = vset.pattern.permute.xlu0 0
        %351 = vperm.xlu0 %350, %v317
        %v352 = vpop.permute.xlu0 %351
        %355 = vset.pattern.permute.xlu0 0
        %356 = vperm.xlu0 %355, %v318
        %v357 = vpop.permute.xlu0 %356
        %v359 = vmul.f32 %v295, %v322
        %v360 = vmul.f32 %v296, %v322
        %v361 = vmul.f32 %v297, %v327
        %v362 = vmul.f32 %v298, %v327
        %v363 = vmul.f32 %v299, %v332
        %v364 = vmul.f32 %v300, %v332
        %v365 = vmul.f32 %v301, %v337
        %v366 = vmul.f32 %v302, %v337
        %v367 = vmul.f32 %v303, %v342
        %v368 = vmul.f32 %v304, %v342
        %v369 = vmul.f32 %v305, %v347
        %v370 = vmul.f32 %v306, %v347
        %v371 = vmul.f32 %v307, %v352
        %v372 = vmul.f32 %v308, %v352
        %v373 = vmul.f32 %v309, %v357
        %v374 = vmul.f32 %v310, %v357
        %v375 = vld [vmem:[%s292] sm:$0xff]
        %v376 = vld [vmem:[%s292 + $0x8] sm:$0xff]
        %v377 = vld [vmem:[%s292 + $0x10] sm:$0xff]
        %v378 = vld [vmem:[%s292 + $0x18] sm:$0xff]
        %v379 = vld [vmem:[%s292 + $0x20] sm:$0xff]
        %v380 = vld [vmem:[%s292 + $0x28] sm:$0xff]
        %v381 = vld [vmem:[%s292 + $0x30] sm:$0xff]
        %v382 = vld [vmem:[%s292 + $0x38] sm:$0xff]
        %384 = vset.pattern.permute.xlu0 0
        %385 = vperm.xlu0 %384, %v375
        %v386 = vpop.permute.xlu0 %385
        %389 = vset.pattern.permute.xlu0 0
        %390 = vperm.xlu0 %389, %v376
        %v391 = vpop.permute.xlu0 %390
        %394 = vset.pattern.permute.xlu0 0
        %395 = vperm.xlu0 %394, %v377
        %v396 = vpop.permute.xlu0 %395
        %399 = vset.pattern.permute.xlu0 0
        %400 = vperm.xlu0 %399, %v378
        %v401 = vpop.permute.xlu0 %400
        %404 = vset.pattern.permute.xlu0 0
        %405 = vperm.xlu0 %404, %v379
        %v406 = vpop.permute.xlu0 %405
        %409 = vset.pattern.permute.xlu0 0
        %410 = vperm.xlu0 %409, %v380
        %v411 = vpop.permute.xlu0 %410
        %414 = vset.pattern.permute.xlu0 0
        %415 = vperm.xlu0 %414, %v381
        %v416 = vpop.permute.xlu0 %415
        %419 = vset.pattern.permute.xlu0 0
        %420 = vperm.xlu0 %419, %v382
        %v421 = vpop.permute.xlu0 %420
        %v423 = vadd.f32 %v359, %v386
        %v424 = vadd.f32 %v360, %v386
        %v425 = vadd.f32 %v361, %v391
        %v426 = vadd.f32 %v362, %v391
        %v427 = vadd.f32 %v363, %v396
        %v428 = vadd.f32 %v364, %v396
        %v429 = vadd.f32 %v365, %v401
        %v430 = vadd.f32 %v366, %v401
        %v431 = vadd.f32 %v367, %v406
        %v432 = vadd.f32 %v368, %v406
        %v433 = vadd.f32 %v369, %v411
        %v434 = vadd.f32 %v370, %v411
        %v435 = vadd.f32 %v371, %v416
        %v436 = vadd.f32 %v372, %v416
        %v437 = vadd.f32 %v373, %v421
        %v438 = vadd.f32 %v374, %v421
        %v439 = vld [vmem:[%s3] sm:$0xf]
        %v440 = vld [vmem:[%s3 + $0x4] sm:$0xf]
        %v441 = vld [vmem:[%s3 + $0x8] sm:$0xf]
        %v442 = vld [vmem:[%s3 + $0xc] sm:$0xf]
        %v443 = vld [vmem:[%s3 + $0x10] sm:$0xf]
        %v444 = vld [vmem:[%s3 + $0x14] sm:$0xf]
        %v445 = vld [vmem:[%s3 + $0x18] sm:$0xf]
        %v446 = vld [vmem:[%s3 + $0x1c] sm:$0xf]
        %v447 = vld [vmem:[%s3 + $0x20] sm:$0xf]
        %v448 = vld [vmem:[%s3 + $0x24] sm:$0xf]
        %v449 = vld [vmem:[%s3 + $0x28] sm:$0xf]
        %v450 = vld [vmem:[%s3 + $0x2c] sm:$0xf]
        %v451 = vld [vmem:[%s3 + $0x30] sm:$0xf]
        %v452 = vld [vmem:[%s3 + $0x34] sm:$0xf]
        %v453 = vld [vmem:[%s3 + $0x38] sm:$0xf]
        %v454 = vld [vmem:[%s3 + $0x3c] sm:$0xf]
        %v455 = vld [vmem:[%s3 + $0x40] sm:$0xf]
        %v456 = vld [vmem:[%s3 + $0x44] sm:$0xf]
        %v457 = vld [vmem:[%s3 + $0x48] sm:$0xf]
        %v458 = vld [vmem:[%s3 + $0x4c] sm:$0xf]
        %v459 = vld [vmem:[%s3 + $0x50] sm:$0xf]
        %v460 = vld [vmem:[%s3 + $0x54] sm:$0xf]
        %v461 = vld [vmem:[%s3 + $0x58] sm:$0xf]
        %v462 = vld [vmem:[%s3 + $0x5c] sm:$0xf]
        %v463 = vpack.c.bf16 %v425, %v423
        %v464 = vpack.c.bf16 %v426, %v424
        %v465 = vpack.c.bf16 %v429, %v427
        %v466 = vpack.c.bf16 %v430, %v428
        %v467 = vpack.c.bf16 %v433, %v431
        %v468 = vpack.c.bf16 %v434, %v432
        %v469 = vpack.c.bf16 %v437, %v435
        %v470 = vpack.c.bf16 %v438, %v436
        %v471 = vld [vmem:[%s4] sm:$0xff]
        %v472 = vld [vmem:[%s4 + $0x8] sm:$0xff]
        %v473 = vld [vmem:[%s4 + $0x10] sm:$0xff]
        %v474 = vld [vmem:[%s4 + $0x18] sm:$0xff]
        %v475 = vld [vmem:[%s4 + $0x20] sm:$0xff]
        %v476 = vld [vmem:[%s4 + $0x28] sm:$0xff]
        %v477 = vld [vmem:[%s4 + $0x30] sm:$0xff]
        %v478 = vld [vmem:[%s4 + $0x38] sm:$0xff]
        %v479 = vld [vmem:[%s4 + $0x40] sm:$0xff]
        %v480 = vld [vmem:[%s4 + $0x48] sm:$0xff]
        %v481 = vld [vmem:[%s4 + $0x50] sm:$0xff]
        %v482 = vld [vmem:[%s4 + $0x58] sm:$0xff]
        %v483 = vld [vmem:[%s4 + $0x60] sm:$0xff]
        %v484 = vld [vmem:[%s4 + $0x68] sm:$0xff]
        %v485 = vld [vmem:[%s4 + $0x70] sm:$0xff]
        %v486 = vld [vmem:[%s4 + $0x78] sm:$0xff]
        %v487 = vld [vmem:[%s4 + $0x80] sm:$0xff]
        %v488 = vld [vmem:[%s4 + $0x88] sm:$0xff]
        %v489 = vld [vmem:[%s4 + $0x90] sm:$0xff]
        %v490 = vld [vmem:[%s4 + $0x98] sm:$0xff]
        %v491 = vld [vmem:[%s4 + $0xa0] sm:$0xff]
        %v492 = vld [vmem:[%s4 + $0xa8] sm:$0xff]
        %v493 = vld [vmem:[%s4 + $0xb0] sm:$0xff]
        %v494 = vld [vmem:[%s4 + $0xb8] sm:$0xff]
        %496 = vset.pattern.permute.xlu0 0
        %497 = vperm.xlu0 %496, %v471
        %v498 = vpop.permute.xlu0 %497
        %501 = vset.pattern.permute.xlu0 0
        %502 = vperm.xlu0 %501, %v472
        %v503 = vpop.permute.xlu0 %502
        %506 = vset.pattern.permute.xlu0 0
        %507 = vperm.xlu0 %506, %v473
        %v508 = vpop.permute.xlu0 %507
        %511 = vset.pattern.permute.xlu0 0
        %512 = vperm.xlu0 %511, %v474
        %v513 = vpop.permute.xlu0 %512
        %516 = vset.pattern.permute.xlu0 0
        %517 = vperm.xlu0 %516, %v475
        %v518 = vpop.permute.xlu0 %517
        %521 = vset.pattern.permute.xlu0 0
        %522 = vperm.xlu0 %521, %v476
        %v523 = vpop.permute.xlu0 %522
        %526 = vset.pattern.permute.xlu0 0
        %527 = vperm.xlu0 %526, %v477
        %v528 = vpop.permute.xlu0 %527
        %531 = vset.pattern.permute.xlu0 0
        %532 = vperm.xlu0 %531, %v478
        %v533 = vpop.permute.xlu0 %532
        %536 = vset.pattern.permute.xlu0 0
        %537 = vperm.xlu0 %536, %v479
        %v538 = vpop.permute.xlu0 %537
        %541 = vset.pattern.permute.xlu0 0
        %542 = vperm.xlu0 %541, %v480
        %v543 = vpop.permute.xlu0 %542
        %546 = vset.pattern.permute.xlu0 0
        %547 = vperm.xlu0 %546, %v481
        %v548 = vpop.permute.xlu0 %547
        %551 = vset.pattern.permute.xlu0 0
        %552 = vperm.xlu0 %551, %v482
        %v553 = vpop.permute.xlu0 %552
        %556 = vset.pattern.permute.xlu0 0
        %557 = vperm.xlu0 %556, %v483
        %v558 = vpop.permute.xlu0 %557
        %561 = vset.pattern.permute.xlu0 0
        %562 = vperm.xlu0 %561, %v484
        %v563 = vpop.permute.xlu0 %562
        %566 = vset.pattern.permute.xlu0 0
        %567 = vperm.xlu0 %566, %v485
        %v568 = vpop.permute.xlu0 %567
        %571 = vset.pattern.permute.xlu0 0
        %572 = vperm.xlu0 %571, %v486
        %v573 = vpop.permute.xlu0 %572
        %576 = vset.pattern.permute.xlu0 0
        %577 = vperm.xlu0 %576, %v487
        %v578 = vpop.permute.xlu0 %577
        %581 = vset.pattern.permute.xlu0 0
        %582 = vperm.xlu0 %581, %v488
        %v583 = vpop.permute.xlu0 %582
        %586 = vset.pattern.permute.xlu0 0
        %587 = vperm.xlu0 %586, %v489
        %v588 = vpop.permute.xlu0 %587
        %591 = vset.pattern.permute.xlu0 0
        %592 = vperm.xlu0 %591, %v490
        %v593 = vpop.permute.xlu0 %592
        %596 = vset.pattern.permute.xlu0 0
        %597 = vperm.xlu0 %596, %v491
        %v598 = vpop.permute.xlu0 %597
        %601 = vset.pattern.permute.xlu0 0
        %602 = vperm.xlu0 %601, %v492
        %v603 = vpop.permute.xlu0 %602
        %606 = vset.pattern.permute.xlu0 0
        %607 = vperm.xlu0 %606, %v493
        %v608 = vpop.permute.xlu0 %607
        %611 = vset.pattern.permute.xlu0 0
        %612 = vperm.xlu0 %611, %v494
        %v613 = vpop.permute.xlu0 %612
        %v639 = vunpack.c.l.b16 %v439
        %v640 = vunpack.c.l.b16 %v440
        %v641 = vunpack.c.l.b16 %v441
        %v642 = vunpack.c.l.b16 %v442
        %v643 = vunpack.c.l.b16 %v443
        %v644 = vunpack.c.l.b16 %v444
        %v645 = vunpack.c.l.b16 %v445
        %v646 = vunpack.c.l.b16 %v446
        %v647 = vunpack.c.l.b16 %v447
        %v648 = vunpack.c.l.b16 %v448
        %v649 = vunpack.c.l.b16 %v449
        %v650 = vunpack.c.l.b16 %v450
        %v651 = vunpack.c.l.b16 %v451
        %v652 = vunpack.c.l.b16 %v452
        %v653 = vunpack.c.l.b16 %v453
        %v654 = vunpack.c.l.b16 %v454
        %v655 = vunpack.c.l.b16 %v455
        %v656 = vunpack.c.l.b16 %v456
        %v657 = vunpack.c.l.b16 %v457
        %v658 = vunpack.c.l.b16 %v458
        %v659 = vunpack.c.l.b16 %v459
        %v660 = vunpack.c.l.b16 %v460
        %v661 = vunpack.c.l.b16 %v461
        %v662 = vunpack.c.l.b16 %v462
        %v663 = vpack.c.b16 %v640, %v639
        %v664 = vpack.c.b16 %v642, %v641
        %v665 = vpack.c.b16 %v644, %v643
        %v666 = vpack.c.b16 %v646, %v645
        %v667 = vpack.c.b16 %v648, %v647
        %v668 = vpack.c.b16 %v650, %v649
        %v669 = vpack.c.b16 %v652, %v651
        %v670 = vpack.c.b16 %v654, %v653
        %v671 = vpack.c.b16 %v656, %v655
        %v672 = vpack.c.b16 %v658, %v657
        %v673 = vpack.c.b16 %v660, %v659
        %v674 = vpack.c.b16 %v662, %v661
        %vm675 = vcmask 523264
        %v677 = vsel %vm675, %v663, 0
        %v680 = vsel %vm675, %v664, 0
        %v683 = vsel %vm675, %v665, 0
        %v686 = vsel %vm675, %v666, 0
        %v689 = vsel %vm675, %v667, 0
        %v692 = vsel %vm675, %v668, 0
        %v695 = vsel %vm675, %v669, 0
        %v698 = vsel %vm675, %v670, 0
        %v701 = vsel %vm675, %v671, 0
        %v704 = vsel %vm675, %v672, 0
        %v707 = vsel %vm675, %v673, 0
        %v710 = vsel %vm675, %v674, 0
        %712 = vmatprep.subr.bf16.mxu0 %v464
        %713 = vmatpush1.bf16.msra.mxu0 %v463
        %714 = vmatprep.subr.bf16.mxu0 %v466
        %715 = vmatpush1.bf16.msra.mxu0 %v465
        %716 = vmatprep.subr.bf16.mxu0 %v468
        %717 = vmatpush1.bf16.msra.mxu0 %v467
        %718 = vmatprep.subr.bf16.mxu0 %v470
        %719 = vmatpush1.bf16.msra.mxu0 %v469
        %720 = vmatprep.subr.bf16.mxu0 0
        %721 = vmatpush1.bf16.msra.mxu0 0
        %722 = vmatprep.subr.bf16.mxu0 0
        %723 = vmatpush1.bf16.msra.mxu0 0
        %724 = vmatprep.subr.bf16.mxu0 0
        %725 = vmatpush1.bf16.msra.mxu0 0
        %726 = vmatprep.subr.bf16.mxu0 0
        %727 = vmatpush1.bf16.msra.mxu0 0
        %728 = vmatprep.subr.bf16.mxu0 0
        %729 = vmatpush1.bf16.msra.mxu0 0
        %730 = vmatprep.subr.bf16.mxu0 0
        %731 = vmatpush1.bf16.msra.mxu0 0
        %732 = vmatprep.subr.bf16.mxu0 0
        %733 = vmatpush1.bf16.msra.mxu0 0
        %734 = vmatprep.subr.bf16.mxu0 0
        %735 = vmatpush1.bf16.msra.mxu0 0
        %736 = vmatprep.subr.bf16.mxu0 0
        %737 = vmatpush1.bf16.msra.mxu0 0
        %738 = vmatprep.subr.bf16.mxu0 0
        %739 = vmatpush1.bf16.msra.mxu0 0
        %740 = vmatprep.subr.bf16.mxu0 0
        %741 = vmatpush1.bf16.msra.mxu0 0
        %742 = vmatprep.subr.bf16.mxu0 0
        %743 = vmatpush1.bf16.msra.mxu0 0
        %744 = vmatprep.mubr.bf16.mxu0 0
        %745 = vmatmul.mubr.bf16.gmra.mrb[0].mxu0 %v677
        %v746 = vpop.f32.mrb[0].mxu0
        %v747 = vadd.f32 %v498, %v746
        %v748 = vpop.f32.mrb[0].mxu0
        %v749 = vadd.f32 %v498, %v748
        %v750 = vpop.f32.mrb[0].mxu0
        %v751 = vadd.f32 %v503, %v750
        %v752 = vpop.f32.mrb[0].mxu0
        %v753 = vadd.f32 %v503, %v752
        %754 = vmatprep.mubr.bf16.mxu0 0
        %755 = vmatmul.mubr.bf16.gmra.mrb[0].mxu0 %v680
        %v756 = vpop.f32.mrb[0].mxu0
        %v757 = vadd.f32 %v508, %v756
        %v758 = vpop.f32.mrb[0].mxu0
        %v759 = vadd.f32 %v508, %v758
        %v760 = vpop.f32.mrb[0].mxu0
        %v761 = vadd.f32 %v513, %v760
        %v762 = vpop.f32.mrb[0].mxu0
        %v763 = vadd.f32 %v513, %v762
        %764 = vmatprep.mubr.bf16.mxu0 0
        %765 = vmatmul.mubr.bf16.gmra.mrb[0].mxu0 %v683
        %v766 = vpop.f32.mrb[0].mxu0
        %v767 = vadd.f32 %v518, %v766
        %v768 = vpop.f32.mrb[0].mxu0
        %v769 = vadd.f32 %v518, %v768
        %v770 = vpop.f32.mrb[0].mxu0
        %v771 = vadd.f32 %v523, %v770
        %v772 = vpop.f32.mrb[0].mxu0
        %v773 = vadd.f32 %v523, %v772
        %774 = vmatprep.mubr.bf16.mxu0 0
        %775 = vmatmul.mubr.bf16.gmra.mrb[0].mxu0 %v686
        %v776 = vpop.f32.mrb[0].mxu0
        %v777 = vadd.f32 %v528, %v776
        %v778 = vpop.f32.mrb[0].mxu0
        %v779 = vadd.f32 %v528, %v778
        %v780 = vpop.f32.mrb[0].mxu0
        %v781 = vadd.f32 %v533, %v780
        %v782 = vpop.f32.mrb[0].mxu0
        %v783 = vadd.f32 %v533, %v782
        %784 = vmatprep.mubr.bf16.mxu0 0
        %785 = vmatmul.mubr.bf16.gmra.mrb[0].mxu0 %v689
        %v786 = vpop.f32.mrb[0].mxu0
        %v787 = vadd.f32 %v538, %v786
        %v788 = vpop.f32.mrb[0].mxu0
        %v789 = vadd.f32 %v538, %v788
        %v790 = vpop.f32.mrb[0].mxu0
        %v791 = vadd.f32 %v543, %v790
        %v792 = vpop.f32.mrb[0].mxu0
        %v793 = vadd.f32 %v543, %v792
        %794 = vmatprep.mubr.bf16.mxu0 0
        %795 = vmatmul.mubr.bf16.gmra.mrb[0].mxu0 %v692
        %v796 = vpop.f32.mrb[0].mxu0
        %v797 = vadd.f32 %v548, %v796
        %v798 = vpop.f32.mrb[0].mxu0
        %v799 = vadd.f32 %v548, %v798
        %v800 = vpop.f32.mrb[0].mxu0
        %v801 = vadd.f32 %v553, %v800
        %v802 = vpop.f32.mrb[0].mxu0
        %v803 = vadd.f32 %v553, %v802
        %804 = vmatprep.mubr.bf16.mxu0 0
        %805 = vmatmul.mubr.bf16.gmra.mrb[0].mxu0 %v695
        %v806 = vpop.f32.mrb[0].mxu0
        %v807 = vadd.f32 %v558, %v806
        %v808 = vpop.f32.mrb[0].mxu0
        %v809 = vadd.f32 %v558, %v808
        %v810 = vpop.f32.mrb[0].mxu0
        %v811 = vadd.f32 %v563, %v810
        %v812 = vpop.f32.mrb[0].mxu0
        %v813 = vadd.f32 %v563, %v812
        %814 = vmatprep.mubr.bf16.mxu0 0
        %815 = vmatmul.mubr.bf16.gmra.mrb[0].mxu0 %v698
        %v816 = vpop.f32.mrb[0].mxu0
        %v817 = vadd.f32 %v568, %v816
        %v818 = vpop.f32.mrb[0].mxu0
        %v819 = vadd.f32 %v568, %v818
        %v820 = vpop.f32.mrb[0].mxu0
        %v821 = vadd.f32 %v573, %v820
        %v822 = vpop.f32.mrb[0].mxu0
        %v823 = vadd.f32 %v573, %v822
        %824 = vmatprep.mubr.bf16.mxu0 0
        %825 = vmatmul.mubr.bf16.gmra.mrb[0].mxu0 %v701
        %v826 = vpop.f32.mrb[0].mxu0
        %v827 = vadd.f32 %v578, %v826
        %v828 = vpop.f32.mrb[0].mxu0
        %v829 = vadd.f32 %v578, %v828
        %v830 = vpop.f32.mrb[0].mxu0
        %v831 = vadd.f32 %v583, %v830
        %v832 = vpop.f32.mrb[0].mxu0
        %v833 = vadd.f32 %v583, %v832
        %834 = vmatprep.mubr.bf16.mxu0 0
        %835 = vmatmul.mubr.bf16.gmra.mrb[0].mxu0 %v704
        %v836 = vpop.f32.mrb[0].mxu0
        %v837 = vadd.f32 %v588, %v836
        %v838 = vpop.f32.mrb[0].mxu0
        %v839 = vadd.f32 %v588, %v838
        %v840 = vpop.f32.mrb[0].mxu0
        %v841 = vadd.f32 %v593, %v840
        %v842 = vpop.f32.mrb[0].mxu0
        %v843 = vadd.f32 %v593, %v842
        %844 = vmatprep.mubr.bf16.mxu0 0
        %845 = vmatmul.mubr.bf16.gmra.mrb[0].mxu0 %v707
        %v846 = vpop.f32.mrb[0].mxu0
        %v847 = vadd.f32 %v598, %v846
        %v848 = vpop.f32.mrb[0].mxu0
        %v849 = vadd.f32 %v598, %v848
        %v850 = vpop.f32.mrb[0].mxu0
        %v851 = vadd.f32 %v603, %v850
        %v852 = vpop.f32.mrb[0].mxu0
        %v853 = vadd.f32 %v603, %v852
        %854 = vmatprep.mubr.bf16.mxu0 0
        %855 = vmatmul.mubr.bf16.gmra.mrb[0].mxu0 %v710
        %v856 = vpop.f32.mrb[0].mxu0
        %v857 = vadd.f32 %v608, %v856
        %v858 = vpop.f32.mrb[0].mxu0
        %v859 = vadd.f32 %v608, %v858
        %v860 = vpop.f32.mrb[0].mxu0
        %v861 = vadd.f32 %v613, %v860
        %v862 = vpop.f32.mrb[0].mxu0
        %v863 = vadd.f32 %v613, %v862
        %864 = vdwg.mxu0
        %v865 = vpack.c.bf16 %v751, %v747
        %v866 = vpack.c.bf16 %v753, %v749
        %v867 = vpack.c.bf16 %v761, %v757
        %v868 = vpack.c.bf16 %v763, %v759
        %v869 = vpack.c.bf16 %v771, %v767
        %v870 = vpack.c.bf16 %v773, %v769
        %v871 = vpack.c.bf16 %v781, %v777
        %v872 = vpack.c.bf16 %v783, %v779
        %v873 = vpack.c.bf16 %v791, %v787
        %v874 = vpack.c.bf16 %v793, %v789
        %v875 = vpack.c.bf16 %v801, %v797
        %v876 = vpack.c.bf16 %v803, %v799
        %v877 = vpack.c.bf16 %v811, %v807
        %v878 = vpack.c.bf16 %v813, %v809
        %v879 = vpack.c.bf16 %v821, %v817
        %v880 = vpack.c.bf16 %v823, %v819
        %v881 = vpack.c.bf16 %v831, %v827
        %v882 = vpack.c.bf16 %v833, %v829
        %v883 = vpack.c.bf16 %v841, %v837
        %v884 = vpack.c.bf16 %v843, %v839
        %v885 = vpack.c.bf16 %v851, %v847
        %v886 = vpack.c.bf16 %v853, %v849
        %v887 = vpack.c.bf16 %v861, %v857
        %v888 = vpack.c.bf16 %v863, %v859
        %v913 = vunpack.c.l.b16 %v865
        %v914 = vunpack.c.l.b16 %v866
        %v915 = vunpack.c.h.b16 %v865
        %v916 = vunpack.c.h.b16 %v866
        %v917 = vunpack.c.l.b16 %v867
        %v918 = vunpack.c.l.b16 %v868
        %v919 = vunpack.c.h.b16 %v867
        %v920 = vunpack.c.h.b16 %v868
        %v921 = vunpack.c.l.b16 %v869
        %v922 = vunpack.c.l.b16 %v870
        %v923 = vunpack.c.h.b16 %v869
        %v924 = vunpack.c.h.b16 %v870
        %v925 = vunpack.c.l.b16 %v871
        %v926 = vunpack.c.l.b16 %v872
        %v927 = vunpack.c.h.b16 %v871
        %v928 = vunpack.c.h.b16 %v872
        %v929 = vunpack.c.l.b16 %v873
        %v930 = vunpack.c.l.b16 %v874
        %v931 = vunpack.c.h.b16 %v873
        %v932 = vunpack.c.h.b16 %v874
        %v933 = vunpack.c.l.b16 %v875
        %v934 = vunpack.c.l.b16 %v876
        %v935 = vunpack.c.h.b16 %v875
        %v936 = vunpack.c.h.b16 %v876
        %v937 = vunpack.c.l.b16 %v877
        %v938 = vunpack.c.l.b16 %v878
        %v939 = vunpack.c.h.b16 %v877
        %v940 = vunpack.c.h.b16 %v878
        %v941 = vunpack.c.l.b16 %v879
        %v942 = vunpack.c.l.b16 %v880
        %v943 = vunpack.c.h.b16 %v879
        %v944 = vunpack.c.h.b16 %v880
        %v945 = vunpack.c.l.b16 %v881
        %v946 = vunpack.c.l.b16 %v882
        %v947 = vunpack.c.h.b16 %v881
        %v948 = vunpack.c.h.b16 %v882
        %v949 = vunpack.c.l.b16 %v883
        %v950 = vunpack.c.l.b16 %v884
        %v951 = vunpack.c.h.b16 %v883
        %v952 = vunpack.c.h.b16 %v884
        %v953 = vunpack.c.l.b16 %v885
        %v954 = vunpack.c.l.b16 %v886
        %v955 = vunpack.c.h.b16 %v885
        %v956 = vunpack.c.h.b16 %v886
        %v957 = vunpack.c.l.b16 %v887
        %v958 = vunpack.c.l.b16 %v888
        %v959 = vunpack.c.h.b16 %v887
        %v960 = vunpack.c.h.b16 %v888
        %v961 = vpack.c.b16 %v914, %v913
        %v962 = vpack.c.b16 %v916, %v915
        %v963 = vpack.c.b16 %v918, %v917
        %v964 = vpack.c.b16 %v920, %v919
        %v965 = vpack.c.b16 %v922, %v921
        %v966 = vpack.c.b16 %v924, %v923
        %v967 = vpack.c.b16 %v926, %v925
        %v968 = vpack.c.b16 %v928, %v927
        %v969 = vpack.c.b16 %v930, %v929
        %v970 = vpack.c.b16 %v932, %v931
        %v971 = vpack.c.b16 %v934, %v933
        %v972 = vpack.c.b16 %v936, %v935
        %v973 = vpack.c.b16 %v938, %v937
        %v974 = vpack.c.b16 %v940, %v939
        %v975 = vpack.c.b16 %v942, %v941
        %v976 = vpack.c.b16 %v944, %v943
        %v977 = vpack.c.b16 %v946, %v945
        %v978 = vpack.c.b16 %v948, %v947
        %v979 = vpack.c.b16 %v950, %v949
        %v980 = vpack.c.b16 %v952, %v951
        %v981 = vpack.c.b16 %v954, %v953
        %v982 = vpack.c.b16 %v956, %v955
        %v983 = vpack.c.b16 %v958, %v957
        %v984 = vpack.c.b16 %v960, %v959
        %1009 = vst [vmem:[%s272] sm:$0xff] %v961
        %1010 = vst [vmem:[%s272 + $0x8] sm:$0xff] %v962
        %1011 = vst [vmem:[%s272 + $0x10] sm:$0xff] %v963
        %1012 = vst [vmem:[%s272 + $0x18] sm:$0xff] %v964
        %1013 = vst [vmem:[%s272 + $0x20] sm:$0xff] %v965
        %1014 = vst [vmem:[%s272 + $0x28] sm:$0xff] %v966
        %1015 = vst [vmem:[%s272 + $0x30] sm:$0xff] %v967
        %1016 = vst [vmem:[%s272 + $0x38] sm:$0xff] %v968
        %1017 = vst [vmem:[%s272 + $0x40] sm:$0xff] %v969
        %1018 = vst [vmem:[%s272 + $0x48] sm:$0xff] %v970
        %1019 = vst [vmem:[%s272 + $0x50] sm:$0xff] %v971
        %1020 = vst [vmem:[%s272 + $0x58] sm:$0xff] %v972
        %1021 = vst [vmem:[%s272 + $0x60] sm:$0xff] %v973
        %1022 = vst [vmem:[%s272 + $0x68] sm:$0xff] %v974
        %1023 = vst [vmem:[%s272 + $0x70] sm:$0xff] %v975
        %1024 = vst [vmem:[%s272 + $0x78] sm:$0xff] %v976
        %1025 = vst [vmem:[%s272 + $0x80] sm:$0xff] %v977
        %1026 = vst [vmem:[%s272 + $0x88] sm:$0xff] %v978
        %1027 = vst [vmem:[%s272 + $0x90] sm:$0xff] %v979
        %1028 = vst [vmem:[%s272 + $0x98] sm:$0xff] %v980
        %1029 = vst [vmem:[%s272 + $0xa0] sm:$0xff] %v981
        %1030 = vst [vmem:[%s272 + $0xa8] sm:$0xff] %v982
        %1031 = vst [vmem:[%s272 + $0xb0] sm:$0xff] %v983
        %1032 = vst [vmem:[%s272 + $0xb8] sm:$0xff] %v984
        %s1033 = sand.u32 %s163, 1
        %s1034 = scalar_lea.sflag [#allocation3], %s1033
        %s1035 = sand.u32 %s163, 1
        %s1036 = smul.addr %s1035, 192
        %s1037 = scalar_lea.vmem [#allocation2], %s1036
        // Predicated region
        $region41: #{tpu_custom_call.1} parent=39 // pred_check
          %p1038 = pneg %p173
        $region42: #{tpu_custom_call.1} parent=39 // pred_check_branch
          %1040 = sbr.rel (%p1038) target = $region44
        $region43: #{tpu_custom_call.1} parent=39 // pred_region
          %s1041 = smul.u32 2, %s24
          %s1043 = ssub.s32 3072, 3072
          %1044 = vsyncadd %s1034, %s1043
          %s1045 = smul.addr %s23, 48
          %s1046 = sadd.s32 %s1041, %s1045
          %s1047 = smul.addr %s1046, 64
          %s1048 = scalar_lea.hbm %s5, %s1047
          %s1049 = sshll.u32 %s1037, 4
          %s1050 = int_to_ptr.vmem [resolvable:$true] %s1049
          %1055 = dma.vmem_to_hbm [thread:$0]  %s1050, 3072, %s1048, %s1034, 128, 128, 8
        $region44: #{tpu_custom_call.1} parent=39 // pred_fallthru
          _
      $region40: #{tpu_custom_call.1} parent=5 // pred_fallthru
        _
      %p1056 = scmp.le.s32.totalorder 2, %s14
      // Predicated region
      $region45: #{tpu_custom_call.1} parent=5 // pred_check
        %p1057 = pneg %p1056
      $region46: #{tpu_custom_call.1} parent=5 // pred_check_branch
        %1059 = sbr.rel (%p1057) target = $region48
      $region47: #{tpu_custom_call.1} parent=5 // pred_region
        %s1060 = ssub.s32 %s14, 2
        // Predicated region
        $region49: #{tpu_custom_call.1} parent=47 // pred_check
          %p1061 = pneg %p179
        $region50: #{tpu_custom_call.1} parent=47 // pred_check_branch
          %1063 = sbr.rel (%p1061) target = $region52
        $region51: #{tpu_custom_call.1} parent=47 // pred_region
          %s1064 = sand.u32 %s164, 1
          %s1065 = scalar_lea.sflag [#allocation3], %s1064
          %s1066 = sand.u32 %s164, 1
          %s1067 = smul.addr %s1066, 192
          %s1068 = scalar_lea.vmem [#allocation2], %s1067
          %1069 = dma.done %s1065, 3072
        $region52: #{tpu_custom_call.1} parent=47 // pred_fallthru
          _
      $region48: #{tpu_custom_call.1} parent=5 // pred_fallthru
        _
    $region6: #{tpu_custom_call.1} parent=1 // loop_footer
      %s18 = sadd.s32 1, %s14
    $region7: #{tpu_custom_call.1} parent=1 // loop_footer_branch
      %13 = sbr.rel target = $region3
    $region8: #{tpu_custom_call.1} parent=1 // loop_exit
      _
    %1070 = vsyncpa [#allocation3], 1
    %s1071 = scalar_lea.sflag [#allocation3], 1
    %1072 = vsyncpa %s1071, 1

</llo_original>
